<compile_context>
chip_gen: v5e
topology: v5e:2x2
jax: 0.10.0
libtpu: 0.0.40
codegen_flags: <defaults>
</compile_context>

<pallas_src>
import functools

import jax
import jax.numpy as jnp
from jax.experimental import pallas as pl
from jax.experimental.pallas import tpu as pltpu


def _round_up(x, k):
    return ((x + k - 1) // k) * k


def _circle_loss_kernel(logits_ref, labels_ref, rowsel_ref, out_ref, *, m, gamma, n_valid):
    """One batch tile: writes per-row (lse - s_true), zeroed on padded rows."""
    logits = logits_ref[...].astype(jnp.float32)          # (TILE_N, C) f32
    labels = labels_ref[...]                               # (TILE_N, 1) int32
    sel = rowsel_ref[...] != 0.0                           # (TILE_N, 1) bool
    tile_n, c = logits.shape

    # alpha / delta with single VPU selects (sel broadcasts over lanes).
    alpha = jnp.where(sel,
                      jnp.maximum(-logits + (1.0 + m), 0.0),
                      jnp.maximum(logits + m, 0.0))        # (TILE_N, C)
    delta = jnp.where(sel, 1.0 - m, m)                     # (TILE_N, 1)

    s = alpha * (logits - delta) * gamma                   # (TILE_N, C) scaled logits

    # Cross entropy with integer class targets (max-shifted logsumexp).
    s_max = jnp.max(s, axis=1, keepdims=True)              # (TILE_N, 1)
    lse = s_max + jnp.log(jnp.sum(jnp.exp(s - s_max), axis=1, keepdims=True))

    col_iota = jax.lax.broadcasted_iota(jnp.int32, (tile_n, c), 1)
    s_true = jnp.sum(jnp.where(col_iota == labels, s, 0.0), axis=1, keepdims=True)

    # Mask padded rows (global row index >= n_valid contributes 0).
    row_iota = jax.lax.broadcasted_iota(jnp.int32, (tile_n, 1), 0)
    global_row = pl.program_id(0) * tile_n + row_iota
    out_ref[...] = jnp.where(global_row < n_valid, lse - s_true, 0.0)


def circle_loss(logits, labels, m=0.25, gamma=256.0, tile_n=512):
    """logits: (N, C) float (any float dtype); labels: (N,) ints, values < min(N, C)."""
    N, C = logits.shape
    labels = labels.astype(jnp.int32)
    in_itemsize = jnp.dtype(logits.dtype).itemsize

    # row_sel[r] = 1.0 iff r appears in labels (O(N) scatter; OOB label values are dropped,
    # matching the previous kernel's "row not selected" behaviour).
    row_sel = jnp.zeros((N,), jnp.float32).at[labels].set(1.0)

    # Tile sizing: keep double-buffered input tile + f32 intermediates well under VMEM
    # (v7x only has 64 MiB physical). Budget ~40 MiB for the working set.
    budget_bytes = 40 * 1024 * 1024
    bytes_per_row = C * (2 * in_itemsize + 5 * 4)      # 2x-buffered input + ~5 f32 temps
    max_tile = max(8, (budget_bytes // max(bytes_per_row, 1)) // 8 * 8)
    tile_n = int(max(8, min(tile_n, max_tile, _round_up(N, 8))))

    num_tiles = pl.cdiv(N, tile_n)
    n_pad = num_tiles * tile_n
    if n_pad != N:
        logits = jnp.pad(logits, ((0, n_pad - N), (0, 0)))
        labels = jnp.pad(labels, (0, n_pad - N))
        row_sel = jnp.pad(row_sel, (0, n_pad - N))

    labels_col = labels.reshape(n_pad, 1)
    row_sel_col = row_sel.reshape(n_pad, 1)

    vmem_est = tile_n * bytes_per_row + 2 * tile_n * 8 * 4
    vmem_limit = int(min(64 * 1024 * 1024, max(32 * 1024 * 1024, 3 * vmem_est // 2)))

    cost = pl.CostEstimate(
        flops=15 * n_pad * C,
        transcendentals=n_pad * C + n_pad,
        bytes_accessed=n_pad * C * in_itemsize + 3 * n_pad * 4,
    )

    per_row = pl.pallas_call(
        functools.partial(_circle_loss_kernel, m=float(m), gamma=float(gamma), n_valid=N),
        out_shape=jax.ShapeDtypeStruct((n_pad, 1), jnp.float32),
        grid=(num_tiles,),
        in_specs=[
            pl.BlockSpec((tile_n, C), lambda i: (i, 0)),   # logits, native dtype
            pl.BlockSpec((tile_n, 1), lambda i: (i, 0)),   # class labels per row
            pl.BlockSpec((tile_n, 1), lambda i: (i, 0)),   # row-selected mask
        ],
        out_specs=pl.BlockSpec((tile_n, 1), lambda i: (i, 0)),
        compiler_params=pltpu.CompilerParams(
            dimension_semantics=("parallel",),
            vmem_limit_bytes=vmem_limit,
        ),
        cost_estimate=cost,
    )(logits, labels_col, row_sel_col)

    return jnp.sum(per_row) / jnp.float32(N)


def _circle_loss_ref(logits, labels, m=0.25, gamma=256.0):
    """Pure-JAX reference mirroring the PyTorch fancy-indexing semantics."""
    N, C = logits.shape
    logits = logits.astype(jnp.float32)
    row_selected = jnp.any(labels[None, :] == jnp.arange(N)[:, None], axis=1)   # (N,)
    alpha = jnp.where(row_selected[:, None],
                      jnp.maximum(-logits + 1.0 + m, 0.0),
                      jnp.maximum(logits + m, 0.0))
    delta = jnp.where(row_selected[:, None], 1.0 - m, m)
    s = alpha * (logits - delta) * gamma
    logz = jax.nn.logsumexp(s, axis=1)
    s_true = jnp.take_along_axis(s, labels[:, None].astype(jnp.int32), axis=1)[:, 0]
    return jnp.mean(logz - s_true)


if __name__ == "__main__":
    key = jax.random.PRNGKey(0)
    k1, k2, k3, k4 = jax.random.split(key, 4)

    # Test 1: small aligned shapes (N=8 rows, C=128 classes), f32.
    N, C = 8, 128
    logits = jax.random.normal(k1, (N, C), dtype=jnp.float32)
    labels = jax.random.randint(k2, (N,), 0, N, dtype=jnp.int32)  # valid as row & class idx
    loss = circle_loss(logits, labels, m=0.25, gamma=256.0)
    jax.block_until_ready(loss)
    ref = _circle_loss_ref(logits, labels, m=0.25, gamma=256.0)
    assert jnp.allclose(loss, ref, rtol=2e-5, atol=1e-4), (loss, ref)

    # Test 2: non-multiple-of-tile batch + multi-tile grid (exercises padding/masking).
    N2, C2 = 12, 256
    logits2 = jax.random.normal(k3, (N2, C2), dtype=jnp.float32)
    labels2 = jax.random.randint(k4, (N2,), 0, N2, dtype=jnp.int32)
    loss2 = circle_loss(logits2, labels2, m=0.25, gamma=256.0, tile_n=8)
    jax.block_until_ready(loss2)
    ref2 = _circle_loss_ref(logits2, labels2, m=0.25, gamma=256.0)
    assert jnp.allclose(loss2, ref2, rtol=2e-5, atol=1e-4), (loss2, ref2)

    # Test 3: bf16 logits streamed in native dtype (cast to f32 inside the kernel).
    logits_bf16 = logits.astype(jnp.bfloat16)
    loss3 = circle_loss(logits_bf16, labels, m=0.25, gamma=256.0)
    jax.block_until_ready(loss3)
    ref3 = _circle_loss_ref(logits_bf16, labels, m=0.25, gamma=256.0)
    assert jnp.allclose(loss3, ref3, rtol=2e-5, atol=1e-4), (loss3, ref3)

    print("KERNEL_OK")
</pallas_src>

<mosaic_0001>
module attributes {stable_mosaic.version = 11 : i64} {
  func.func @_circle_loss_kernel(%arg0: i32, %arg1: memref<8x128xf32, #tpu.memory_space<vmem>>, %arg2: memref<8x1xi32, #tpu.memory_space<vmem>>, %arg3: memref<8x1xf32, #tpu.memory_space<vmem>>, %arg4: memref<8x1xf32, #tpu.memory_space<vmem>>) attributes {dimension_semantics = [#tpu.dimension_semantics<parallel>], iteration_bounds = array<i64: 1>, scalar_prefetch = 0 : i64, scratch_operands = 0 : i64, tpu.core_type = #tpu.core_type<tc>, window_params = [{transform_indices = @transform_0, window_bounds = array<i64: 8, 128>}, {transform_indices = @transform_1, window_bounds = array<i64: 8, 1>}, {transform_indices = @transform_2, window_bounds = array<i64: 8, 1>}, {transform_indices = @transform_3, window_bounds = array<i64: 8, 1>}]} {
    %c0 = arith.constant 0 : index
    %c0_0 = arith.constant 0 : index
    %0 = vector.load %arg1[%c0, %c0_0] : memref<8x128xf32, #tpu.memory_space<vmem>>, vector<8x128xf32>
    %c0_1 = arith.constant 0 : index
    %c0_2 = arith.constant 0 : index
    %1 = vector.load %arg2[%c0_1, %c0_2] : memref<8x1xi32, #tpu.memory_space<vmem>>, vector<8x1xi32>
    %c0_3 = arith.constant 0 : index
    %c0_4 = arith.constant 0 : index
    %2 = vector.load %arg3[%c0_3, %c0_4] : memref<8x1xf32, #tpu.memory_space<vmem>>, vector<8x1xf32>
    %cst = arith.constant 0.000000e+00 : f32
    %3 = vector.broadcast %cst : f32 to vector<8x1xf32>
    %4 = arith.cmpf one, %2, %3 : vector<8x1xf32>
    %cst_5 = arith.constant 0.000000e+00 : f32
    %5 = vector.broadcast %cst_5 : f32 to vector<8x128xf32>
    %6 = arith.subf %5, %0 : vector<8x128xf32>
    %cst_6 = arith.constant 1.250000e+00 : f32
    %7 = vector.broadcast %cst_6 : f32 to vector<8x128xf32>
    %8 = arith.addf %6, %7 : vector<8x128xf32>
    %cst_7 = arith.constant 0.000000e+00 : f32
    %9 = vector.broadcast %cst_7 : f32 to vector<8x128xf32>
    %10 = arith.maximumf %8, %9 : vector<8x128xf32>
    %cst_8 = arith.constant 2.500000e-01 : f32
    %11 = vector.broadcast %cst_8 : f32 to vector<8x128xf32>
    %12 = arith.addf %0, %11 : vector<8x128xf32>
    %cst_9 = arith.constant 0.000000e+00 : f32
    %13 = vector.broadcast %cst_9 : f32 to vector<8x128xf32>
    %14 = arith.maximumf %12, %13 : vector<8x128xf32>
    %15 = vector.shape_cast %4 : vector<8x1xi1> to vector<8x1xi1>
    %16 = vector.broadcast %15 : vector<8x1xi1> to vector<8x128xi1>
    %17 = arith.select %16, %10, %14 : vector<8x128xi1>, vector<8x128xf32>
    %cst_10 = arith.constant 7.500000e-01 : f32
    %cst_11 = arith.constant 2.500000e-01 : f32
    %18 = vector.broadcast %cst_10 : f32 to vector<8x1xf32>
    %19 = vector.broadcast %cst_11 : f32 to vector<8x1xf32>
    %20 = arith.select %4, %18, %19 : vector<8x1xi1>, vector<8x1xf32>
    %21 = vector.broadcast %20 : vector<8x1xf32> to vector<8x128xf32>
    %22 = arith.subf %0, %21 : vector<8x128xf32>
    %23 = arith.mulf %17, %22 : vector<8x128xf32>
    %cst_12 = arith.constant 2.560000e+02 : f32
    %24 = vector.broadcast %cst_12 : f32 to vector<8x128xf32>
    %25 = arith.mulf %23, %24 : vector<8x128xf32>
    %cst_13 = arith.constant dense<0xFF800000> : vector<8xf32>
    %26 = vector.multi_reduction <maximumf>, %25, %cst_13 [1] : vector<8x128xf32> to vector<8xf32>
    %27 = vector.shape_cast %26 : vector<8xf32> to vector<8x1xf32>
    %28 = vector.broadcast %27 : vector<8x1xf32> to vector<8x128xf32>
    %29 = arith.subf %25, %28 : vector<8x128xf32>
    %30 = math.exp %29 : vector<8x128xf32>
    %cst_14 = arith.constant dense<0.000000e+00> : vector<8xf32>
    %31 = vector.multi_reduction <add>, %30, %cst_14 [1] : vector<8x128xf32> to vector<8xf32>
    %32 = vector.shape_cast %31 : vector<8xf32> to vector<8x1xf32>
    %33 = math.log %32 : vector<8x1xf32>
    %34 = arith.addf %27, %33 : vector<8x1xf32>
    %35 = tpu.iota {dimensions = array<i32: 1>} : vector<8x128xi32>
    %36 = vector.broadcast %1 : vector<8x1xi32> to vector<8x128xi32>
    %37 = arith.cmpi eq, %35, %36 : vector<8x128xi32>
    %cst_15 = arith.constant 0.000000e+00 : f32
    %38 = vector.broadcast %cst_15 : f32 to vector<8x128xf32>
    %39 = arith.select %37, %25, %38 : vector<8x128xi1>, vector<8x128xf32>
    %cst_16 = arith.constant dense<0.000000e+00> : vector<8xf32>
    %40 = vector.multi_reduction <add>, %39, %cst_16 [1] : vector<8x128xf32> to vector<8xf32>
    %41 = vector.shape_cast %40 : vector<8xf32> to vector<8x1xf32>
    %42 = tpu.iota {dimensions = array<i32: 0>} : vector<8x1xi32>
    %c8_i32 = arith.constant 8 : i32
    %43 = arith.muli %arg0, %c8_i32 : i32
    %44 = vector.broadcast %43 : i32 to vector<8x1xi32>
    %45 = arith.addi %44, %42 : vector<8x1xi32>
    %c8_i32_17 = arith.constant 8 : i32
    %46 = vector.broadcast %c8_i32_17 : i32 to vector<8x1xi32>
    %47 = arith.cmpi slt, %45, %46 : vector<8x1xi32>
    %48 = arith.subf %34, %41 : vector<8x1xf32>
    %cst_18 = arith.constant 0.000000e+00 : f32
    %49 = vector.broadcast %cst_18 : f32 to vector<8x1xf32>
    %50 = arith.select %47, %48, %49 : vector<8x1xi1>, vector<8x1xf32>
    %c0_19 = arith.constant 0 : index
    %c0_20 = arith.constant 0 : index
    %51 = vector.load %arg4[%c0_19, %c0_20] : memref<8x1xf32, #tpu.memory_space<vmem>>, vector<8x1xf32>
    tpu.vector_store %arg4[%c0_19, %c0_20], %50 {strides = array<i32>} : memref<8x1xf32, #tpu.memory_space<vmem>>, vector<8x1xf32>,
    return
  }
  func.func @transform_0(%arg0: i32) -> (i32, i32) {
    %c0_i32 = arith.constant 0 : i32
    %c0_i32_0 = arith.constant 0 : i32
    return %arg0, %c0_i32 : i32, i32
  }
  func.func @transform_1(%arg0: i32) -> (i32, i32) {
    %c0_i32 = arith.constant 0 : i32
    %c0_i32_0 = arith.constant 0 : i32
    return %arg0, %c0_i32 : i32, i32
  }
  func.func @transform_2(%arg0: i32) -> (i32, i32) {
    %c0_i32 = arith.constant 0 : i32
    %c0_i32_0 = arith.constant 0 : i32
    return %arg0, %c0_i32 : i32, i32
  }
  func.func @transform_3(%arg0: i32) -> (i32, i32) {
    %c0_i32 = arith.constant 0 : i32
    %c0_i32_0 = arith.constant 0 : i32
    return %arg0, %c0_i32 : i32, i32
  }
}

</mosaic_0001>

<llo_original>
// kernel: tpu_custom_call.1
$region0: #{tpu_custom_call.1}
  #allocation0 [shape = 'u32[]', space=smem, size = 0x4, offset = 0x4, fixed_abs, tag = 'smem constant byte address 0x4 - core index']
  #allocation1 [shape = 'u32[72,128]{1,0:T(1,128)}', space=vmem, size = 0x9000, scoped, tag = 'internal scratch']
  %s0 = inlined_call_operand.vmem [shape: f32[8,128], index: 0, kind: input, shape index: {}]
  %s1 = inlined_call_operand.vmem [shape: s32[8,1], index: 1, kind: input, shape index: {}]
  %s2 = inlined_call_operand.vmem [shape: f32[8,1], index: 2, kind: input, shape index: {}]
  %s3 = inlined_call_operand.vmem [shape: f32[8,1], index: 3, kind: output, shape index: {}]
  %s4 = sld [smem:[#allocation0]]
  $region22: #{tpu_custom_call.1} parent=0
    _
  %s6 = ssub.s32 1, %s4
  %s7 = scalar_select 0, %s6, %s4
  // Predicated region
  $region2: #{tpu_custom_call.1} parent=0 // pred_check
    _
  $region3: #{tpu_custom_call.1} parent=0 // pred_check_branch
    %9 = sbr.rel (0) target = $region5
  $region4: #{tpu_custom_call.1} parent=0 // pred_region
    _
  $region5: #{tpu_custom_call.1} parent=0 // pred_fallthru
    _
  // Predicated region
  $region6: #{tpu_custom_call.1} parent=0 // pred_check
    _
  $region7: #{tpu_custom_call.1} parent=0 // pred_check_branch
    %11 = sbr.rel (0) target = $region9
  $region8: #{tpu_custom_call.1} parent=0 // pred_region
    _
  $region9: #{tpu_custom_call.1} parent=0 // pred_fallthru
    _
  // Predicated region
  $region10: #{tpu_custom_call.1} parent=0 // pred_check
    _
  $region11: #{tpu_custom_call.1} parent=0 // pred_check_branch
    %13 = sbr.rel (0) target = $region13
  $region12: #{tpu_custom_call.1} parent=0 // pred_region
    _
  $region13: #{tpu_custom_call.1} parent=0 // pred_fallthru
    _
  %v14 = vld [vmem:[%s0] sm:$0xff]
  %v15 = vld [vmem:[%s1] sm:$0xff]
  %v16 = vld [vmem:[%s2] sm:$0xff]
  %vm17 = vcmp.ne.f32.partialorder %v16, 0.0
  %v18 = vsub.f32 0.0, %v14
  %v19 = vadd.f32 %v18, 1.25
  %v20 = vmax.f32 %v19, 0.0
  %v21 = vadd.f32 %v14, 0.25
  %v22 = vmax.f32 %v21, 0.0
  %v23 = vsel %vm17, 1, 0
  %24 = vset.pattern.permute.xlu0 0
  %25 = vperm.xlu0 %24, %v23
  %v26 = vpop.permute.xlu0 %25
  %vm27 = vcmp.eq.s32.totalorder %v26, 1
  %v28 = vsel %vm27, %v20, %v22
  %v29 = vsel %vm17, 0.75, 0.25
  %31 = vset.pattern.permute.xlu0 0
  %32 = vperm.xlu0 %31, %v29
  %v33 = vpop.permute.xlu0 %32
  %v35 = vsub.f32 %v14, %v33
  %v36 = vmul.f32 %v28, %v35
  %v37 = vmul.f32 %v36, 256.0
  %38 = vmax.xlane.f32.xlu0 %v37
  %v39 = vpop.xlane.xlu0 %38
  %v40 = vsub.f32 %v37, %v39
  %v41 = vmul.f32 %v40, 1.442695
  %v42 = vpow.pop %v41
  %43 = vadd.xlane.f32.xlu0 %v42
  %v44 = vpop.xlane.xlu0 %43
  %v45 = vlog2.pop %v44
  %v46 = vmul.f32 %v45, 0.6931472
  %v47 = vadd.f32 %v39, %v46
  %v48 = vlaneseq
  %v49 = vand.u32 %v48, 127
  %50 = vset.pattern.permute.xlu0 0
  %51 = vperm.xlu0 %50, %v15
  %v52 = vpop.permute.xlu0 %51
  %vm53 = vcmp.eq.s32.totalorder %v49, %v52
  %v54 = vsel %vm53, %v37, 0.0
  %55 = vadd.xlane.f32.xlu0 %v54
  %v56 = vpop.xlane.xlu0 %55
  %v57 = vlaneseq
  %v58 = vshrl.u32 %v57, 7
  %s59 = smul.u32 0, 8
  %v60 = vstv %s59
  %v61 = vadd.s32 %v60, %v58
  %vm62 = vcmp.lt.s32.totalorder %v61, 8
  %v63 = vsub.f32 %v47, %v56
  %v64 = vsel %vm62, %v63, 0.0
  %vm65 = vcmask 7168
  %66 = vst.msk [vmem:[%s3] sm:$0xff] %vm65, %v64
  // Predicated region
  $region14: #{tpu_custom_call.1} parent=0 // pred_check
    _
  $region15: #{tpu_custom_call.1} parent=0 // pred_check_branch
    %68 = sbr.rel (0) target = $region17
  $region16: #{tpu_custom_call.1} parent=0 // pred_region
    _
  $region17: #{tpu_custom_call.1} parent=0 // pred_fallthru
    _
  // Predicated region
  $region18: #{tpu_custom_call.1} parent=0 // pred_check
    _
  $region19: #{tpu_custom_call.1} parent=0 // pred_check_branch
    %70 = sbr.rel (0) target = $region21
  $region20: #{tpu_custom_call.1} parent=0 // pred_region
    _
  $region21: #{tpu_custom_call.1} parent=0 // pred_fallthru
    _

</llo_original>
